<compile_context>
chip_gen: v7x
topology: tpu7x:2x2x1
jax: 0.10.0
libtpu: 0.0.40
codegen_flags: <defaults>
</compile_context>

<pallas_src>
import functools

import numpy as np
import jax
import jax.numpy as jnp
from jax.experimental import pallas as pl
from jax.experimental.pallas import tpu as pltpu

NEG = -1e30   # "-inf" stand-in that stays finite under repeated f32 addition
LS = 8        # label axis padded to one sublane tile
BP = 128      # sequences (batch) per lane tile


# --------------------------- phase 1: emissions ------------------------------------
def emissions_kernel(hid_ref, w_ref, bias_ref, em_ref):
    # hid_ref: (TT, H, BP) bf16   w_ref: (LS, H) bf16   bias_ref: (LS, 1) f32
    # em_ref : (TT, LS, BP) f32   (dropout = identity in eval)
    TT = hid_ref.shape[0]
    bp = hid_ref.shape[-1]
    w = w_ref[...]
    bias2 = jnp.broadcast_to(bias_ref[...], (em_ref.shape[1], 2 * bp))      # hoisted once
    for p in range(TT // 2):                      # two 128-lane tiles per dot (N = 256)
        h2 = jnp.concatenate([hid_ref[2 * p], hid_ref[2 * p + 1]], axis=-1)  # (H, 2*BP)
        y = jnp.dot(w, h2, preferred_element_type=jnp.float32) + bias2       # (LS, 2*BP)
        em_ref[2 * p] = y[:, :bp]
        em_ref[2 * p + 1] = y[:, bp:]


# --------------------------- phase 2: CRF Viterbi decode ----------------------------
def crf_viterbi_kernel(maxlen_ref,                           # scalar prefetch (SMEM): (num_chunks,)
                       len_ref, em_ref, start_ref, end_ref, trans_ref,
                       tags_ref,                             # out: (Tpad, BP) int32
                       bp_ref,                               # scratch: (Tpad, BP) int32, bit-packed
                       *, num_labels):
    L = num_labels
    c = pl.program_id(0)
    Tpad, _, bp = em_ref.shape
    maxlen = maxlen_ref[c]

    lens = len_ref[...]                                      # (1, BP) per-lane seq lengths
    trans = trans_ref[...]                                   # (LS, LS), padded rows/cols = NEG
    sub_iota = jax.lax.broadcasted_iota(jnp.int32, (LS, bp), 0)
    # loop-invariant transition columns, lane-broadcast once (hoisted out of the DP loop)
    trans_cols = [jnp.broadcast_to(trans[:, cur:cur + 1], (LS, bp)) for cur in range(L)]
    if L < LS:
        neg_fill = jnp.full((LS - L, bp), NEG, jnp.float32)

    # ---- forward max-sum DP (labels on sublanes, sequences on lanes) ----
    score0 = start_ref[...] + em_ref[0]                      # (LS, BP)

    def fwd_body(t, score):
        # new[cur, b] = max_prev(score[prev, b] + trans[prev, cur]) + em[t, cur, b]
        maxes = []
        packed = jnp.zeros((1, bp), jnp.int32)
        for cur in range(L):                                 # real labels only
            tmp = score + trans_cols[cur]                    # (LS, BP)
            m = jnp.max(tmp, axis=0, keepdims=True)          # (1, BP)
            idx = jnp.min(jnp.where(tmp == m, sub_iota, LS - 1),
                          axis=0, keepdims=True)             # first prev achieving the max
            maxes.append(m)
            packed = packed | (idx << (3 * cur))             # 3 bits per label, <= 24 bits total
        if L < LS:
            maxes.append(neg_fill)                           # keep padded rows hugely negative
        new_score = jnp.concatenate(maxes, axis=0) + em_ref[t]          # (LS, BP)
        bp_ref[pl.ds(t, 1), :] = packed                      # one packed store per DP step
        valid = t < lens                                     # per-lane freeze past each seq end
        return jnp.where(valid, new_score, score)

    score = jax.lax.fori_loop(1, maxlen, fwd_body, score0)
    final = score + end_ref[...]                             # (LS, BP)

    fmax = jnp.max(final, axis=0, keepdims=True)
    best_last = jnp.min(jnp.where(final == fmax, sub_iota, LS - 1),
                        axis=0, keepdims=True).astype(jnp.int32)        # (1, BP)

    # ---- backtrack (per-lane), tag 0 for pad positions / pad lanes ----
    tags_ref[...] = jnp.zeros(tags_ref.shape, tags_ref.dtype)

    def bt_body(i, cur):
        t = maxlen - 1 - i
        bp_next = bp_ref[pl.ds(jnp.minimum(t + 1, Tpad - 1), 1), :]     # (1, BP) packed
        gathered = jax.lax.shift_right_logical(bp_next, 3 * cur) & 7    # per-lane unpack (VPU)
        cur_new = jnp.where(t == lens - 1, best_last,
                            jnp.where(t < lens - 1, gathered, 0))
        tags_ref[pl.ds(t, 1), :] = jnp.where(t < lens, cur_new, 0)
        return cur_new

    jax.lax.fori_loop(0, maxlen, bt_body, jnp.zeros((1, bp), jnp.int32))


# --------------------------------- wrapper ------------------------------------------
def _bert_crf_decode_impl(hidden, attention_mask, W, bias, start, end, trans):
    """hidden: (B,T,H) f32 encoder output; attention_mask: (B,T) {0,1} contiguous prefix.
    Returns (tags (B,T) int32, emissions (B,T,L) float32)."""
    B, T, H = hidden.shape
    L = W.shape[1]
    assert 1 <= L <= LS

    num_chunks = pl.cdiv(B, BP)
    Bpad = num_chunks * BP

    # time padded so each phase-1 grid step covers TT >= 8 time steps (amortize step overhead)
    if T <= 16:
        TT = ((T + 7) // 8) * 8
    elif T <= 64:
        TT = 16
    else:
        TT = 32
    Tpad = ((T + TT - 1) // TT) * TT
    assert TT % 2 == 0 and Tpad % TT == 0

    # label axis -> sublanes; padded labels get NEG so they never win a max
    w_t = jnp.zeros((LS, H), jnp.float32).at[:L, :].set(W.T).astype(jnp.bfloat16)
    bias_p = jnp.full((LS, 1), NEG, jnp.float32).at[:L, 0].set(bias)
    start_p = jnp.full((LS, 1), NEG, jnp.float32).at[:L, 0].set(start)
    end_p = jnp.full((LS, 1), NEG, jnp.float32).at[:L, 0].set(end)
    trans_p = jnp.full((LS, LS), NEG, jnp.float32).at[:L, :L].set(trans)

    # hidden: cast to bf16 FIRST, then pad + chunk-major transpose (fused under jit)
    hid_bf = hidden.astype(jnp.bfloat16)
    hid_bf = jnp.pad(hid_bf, ((0, Bpad - B), (0, Tpad - T), (0, 0)))        # (Bpad, Tpad, H)
    hid_cthb = jnp.transpose(hid_bf.reshape(num_chunks, BP, Tpad, H),
                             (0, 2, 3, 1))                                  # (C, Tpad, H, BP)

    lens = jnp.pad(jnp.sum(attention_mask.astype(jnp.int32), axis=1), (0, Bpad - B))
    lens_c = lens.reshape(num_chunks, 1, BP)
    chunk_maxlen = jnp.max(lens.reshape(num_chunks, BP), axis=1).astype(jnp.int32)

    # ---- phase 1: emissions[c, t, l, b] = (W^T @ hidden^T)[l, b] + bias[l] ----
    em_cp = pl.pallas_call(
        emissions_kernel,
        out_shape=jax.ShapeDtypeStruct((num_chunks, Tpad, LS, BP), jnp.float32),
        grid=(num_chunks, Tpad // TT),
        in_specs=[
            pl.BlockSpec((None, TT, H, BP), lambda c, t: (c, t, 0, 0)),      # hidden^T (bf16)
            pl.BlockSpec((LS, H), lambda c, t: (0, 0)),                      # W^T (bf16)
            pl.BlockSpec((LS, 1), lambda c, t: (0, 0)),                      # bias
        ],
        out_specs=pl.BlockSpec((None, TT, LS, BP), lambda c, t: (c, t, 0, 0)),
        compiler_params=pltpu.CompilerParams(
            dimension_semantics=("parallel", "parallel")),
    )(hid_cthb, w_t, bias_p)

    # ---- phase 2: Viterbi decode, one grid step per 128-sequence chunk ----
    tags_ctb = pl.pallas_call(
        functools.partial(crf_viterbi_kernel, num_labels=L),
        out_shape=jax.ShapeDtypeStruct((num_chunks, Tpad, BP), jnp.int32),
        grid_spec=pltpu.PrefetchScalarGridSpec(
            num_scalar_prefetch=1,
            grid=(num_chunks,),
            in_specs=[
                pl.BlockSpec((None, 1, BP), lambda c, ml: (c, 0, 0)),            # seq lengths
                pl.BlockSpec((None, Tpad, LS, BP), lambda c, ml: (c, 0, 0, 0)),  # emissions
                pl.BlockSpec((LS, 1), lambda c, ml: (0, 0)),                     # start_transitions
                pl.BlockSpec((LS, 1), lambda c, ml: (0, 0)),                     # end_transitions
                pl.BlockSpec((LS, LS), lambda c, ml: (0, 0)),                    # transitions
            ],
            out_specs=pl.BlockSpec((None, Tpad, BP), lambda c, ml: (c, 0, 0)),
            scratch_shapes=[pltpu.VMEM((Tpad, BP), jnp.int32)],                  # packed backpointers
        ),
        compiler_params=pltpu.CompilerParams(dimension_semantics=("parallel",)),
    )(chunk_maxlen, lens_c, em_cp, start_p, end_p, trans_p)

    # slice BEFORE transposing the outputs (cheap relayout)
    tags = jnp.transpose(tags_ctb[:, :T, :], (0, 2, 1)).reshape(Bpad, T)[:B]
    emissions = jnp.transpose(em_cp[:, :T, :L, :], (0, 3, 1, 2)).reshape(Bpad, T, L)[:B]
    return tags, emissions


bert_crf_decode = jax.jit(_bert_crf_decode_impl)


# ------------------------------ numpy reference -------------------------------------
def ref_viterbi(em, mask, start, end, trans):
    """torchcrf-style viterbi_decode with the emission add hoisted (same f32 op order
    as the kernel), run on the kernel's own emissions."""
    em = np.asarray(em, np.float32)
    start = np.asarray(start, np.float32)
    end = np.asarray(end, np.float32)
    trans = np.asarray(trans, np.float32)
    B, T, L = em.shape
    out = np.zeros((B, T), np.int32)
    for bb in range(B):
        sl = int(np.sum(mask[bb]))
        score = start + em[bb, 0]
        hist = []
        for t in range(1, sl):
            mat = score[:, None] + trans                  # (prev, cur)
            hist.append(np.argmax(mat, axis=0))
            score = np.max(mat, axis=0) + em[bb, t]
        score = score + end
        best = [int(np.argmax(score))]
        for h in reversed(hist):
            best.append(int(h[best[-1]]))
        best.reverse()
        out[bb, :sl] = np.asarray(best, np.int32)
    return out


if __name__ == "__main__":
    B, T, H, L = 2, 8, 32, 3   # batch, seq, hidden_size, num_labels (BIO)

    key = jax.random.PRNGKey(0)
    k1, k2, k3, k4, k5, k6 = jax.random.split(key, 6)

    # synthetic deterministic "last_encoder_layer" (stands in for the pretrained BERT output)
    hidden = jax.random.normal(k1, (B, T, H), jnp.float32)
    # position_wise_ffn parameters (nn.Linear(hidden_size, num_labels))
    W = jax.random.normal(k2, (H, L), jnp.float32) / jnp.sqrt(H)
    bias = 0.1 * jax.random.normal(k3, (L,), jnp.float32)
    # CRF parameters (torchcrf-style uniform(-0.1, 0.1))
    start = jax.random.uniform(k4, (L,), jnp.float32, -0.1, 0.1)
    end = jax.random.uniform(k5, (L,), jnp.float32, -0.1, 0.1)
    trans = jax.random.uniform(k6, (L, L), jnp.float32, -0.1, 0.1)

    attention_mask = jnp.array([[1, 1, 1, 1, 1, 1, 1, 1],
                                [1, 1, 1, 1, 1, 0, 0, 0]], jnp.int32)

    tags, emissions = bert_crf_decode(hidden, attention_mask, W, bias, start, end, trans)
    tags = jax.block_until_ready(tags)
    emissions = jax.block_until_ready(emissions)

    # sanity: emissions match a plain-JAX bf16-input linear layer
    em_ref = np.asarray(
        jnp.einsum("bth,hl->btl", hidden.astype(jnp.bfloat16), W.astype(jnp.bfloat16),
                   preferred_element_type=jnp.float32) + bias)
    assert np.allclose(np.asarray(emissions), em_ref, atol=2e-2), "emission mismatch"

    # exact check of the Viterbi decode against a reference DP on the kernel's own emissions
    ref_tags = ref_viterbi(np.asarray(emissions), np.asarray(attention_mask),
                           np.asarray(start), np.asarray(end), np.asarray(trans))
    assert np.array_equal(np.asarray(tags), ref_tags), (np.asarray(tags), ref_tags)

    print("KERNEL_OK")
</pallas_src>

<mosaic_0001>
module attributes {stable_mosaic.version = 11 : i64} {
  func.func @emissions_kernel(%arg0: i32, %arg1: i32, %arg2: memref<1x8x32x128xbf16, #tpu.memory_space<vmem>>, %arg3: memref<8x32xbf16, #tpu.memory_space<vmem>>, %arg4: memref<8x1xf32, #tpu.memory_space<vmem>>, %arg5: memref<1x8x8x128xf32, #tpu.memory_space<vmem>>) attributes {dimension_semantics = [#tpu.dimension_semantics<parallel>, #tpu.dimension_semantics<parallel>], iteration_bounds = array<i64: 1, 1>, scalar_prefetch = 0 : i64, scratch_operands = 0 : i64, tpu.core_type = #tpu.core_type<tc>, window_params = [{transform_indices = @transform_0, window_bounds = array<i64: 1, 8, 32, 128>}, {pipeline_mode = #tpu.pipeline_mode<synchronous>, transform_indices = @transform_1, window_bounds = array<i64: 8, 32>}, {pipeline_mode = #tpu.pipeline_mode<synchronous>, transform_indices = @transform_2, window_bounds = array<i64: 8, 1>}, {transform_indices = @transform_3, window_bounds = array<i64: 1, 8, 8, 128>}]} {
    %c0 = arith.constant 0 : index
    %c0_0 = arith.constant 0 : index
    %0 = vector.load %arg3[%c0, %c0_0] : memref<8x32xbf16, #tpu.memory_space<vmem>>, vector<8x32xbf16>
    %c0_1 = arith.constant 0 : index
    %c0_2 = arith.constant 0 : index
    %1 = vector.load %arg4[%c0_1, %c0_2] : memref<8x1xf32, #tpu.memory_space<vmem>>, vector<8x1xf32>
    %2 = vector.shape_cast %1 : vector<8x1xf32> to vector<8x1xf32>
    %3 = vector.broadcast %2 : vector<8x1xf32> to vector<8x256xf32>
    %c0_3 = arith.constant 0 : index
    %c0_4 = arith.constant 0 : index
    %c0_5 = arith.constant 0 : index
    %c0_6 = arith.constant 0 : index
    %4 = vector.load %arg2[%c0_3, %c0_4, %c0_5, %c0_6] : memref<1x8x32x128xbf16, #tpu.memory_space<vmem>>, vector<1x1x32x128xbf16>
    %5 = vector.shape_cast %4 : vector<1x1x32x128xbf16> to vector<32x128xbf16>
    %c0_7 = arith.constant 0 : index
    %c1 = arith.constant 1 : index
    %c0_8 = arith.constant 0 : index
    %c0_9 = arith.constant 0 : index
    %6 = vector.load %arg2[%c0_7, %c1, %c0_8, %c0_9] : memref<1x8x32x128xbf16, #tpu.memory_space<vmem>>, vector<1x1x32x128xbf16>
    %7 = vector.shape_cast %6 : vector<1x1x32x128xbf16> to vector<32x128xbf16>
    %8 = tpu.concatenate %5, %7 in 1 : vector<32x128xbf16>, vector<32x128xbf16> -> vector<32x256xbf16>
    %cst = arith.constant dense<0.000000e+00> : vector<8x256xf32>
    %9 = tpu.matmul %0, %8, %cst {dimension_numbers = #tpu.dot_dimension_numbers<[1], [0], [0], [1], [0, 0, 1, 1], [], []>} : vector<8x32xbf16>, vector<32x256xbf16>, vector<8x256xf32> -> vector<8x256xf32>
    %10 = arith.addf %9, %3 : vector<8x256xf32>
    %11 = vector.extract_strided_slice %10 {offsets = [0, 0], sizes = [8, 128], strides = [1, 1]} : vector<8x256xf32> to vector<8x128xf32>
    %c0_10 = arith.constant 0 : index
    %c0_11 = arith.constant 0 : index
    %c0_12 = arith.constant 0 : index
    %c0_13 = arith.constant 0 : index
    %12 = vector.load %arg5[%c0_10, %c0_11, %c0_12, %c0_13] : memref<1x8x8x128xf32, #tpu.memory_space<vmem>>, vector<1x1x8x128xf32>
    %13 = vector.shape_cast %12 : vector<1x1x8x128xf32> to vector<8x128xf32>
    %14 = vector.shape_cast %11 : vector<8x128xf32> to vector<1x1x8x128xf32>
    tpu.vector_store %arg5[%c0_10, %c0_11, %c0_12, %c0_13], %14 {strides = array<i32>} : memref<1x8x8x128xf32, #tpu.memory_space<vmem>>, vector<1x1x8x128xf32>,
    %15 = vector.extract_strided_slice %10 {offsets = [0, 128], sizes = [8, 128], strides = [1, 1]} : vector<8x256xf32> to vector<8x128xf32>
    %c0_14 = arith.constant 0 : index
    %c1_15 = arith.constant 1 : index
    %c0_16 = arith.constant 0 : index
    %c0_17 = arith.constant 0 : index
    %16 = vector.load %arg5[%c0_14, %c1_15, %c0_16, %c0_17] : memref<1x8x8x128xf32, #tpu.memory_space<vmem>>, vector<1x1x8x128xf32>
    %17 = vector.shape_cast %16 : vector<1x1x8x128xf32> to vector<8x128xf32>
    %18 = vector.shape_cast %15 : vector<8x128xf32> to vector<1x1x8x128xf32>
    tpu.vector_store %arg5[%c0_14, %c1_15, %c0_16, %c0_17], %18 {strides = array<i32>} : memref<1x8x8x128xf32, #tpu.memory_space<vmem>>, vector<1x1x8x128xf32>,
    %c0_18 = arith.constant 0 : index
    %c2 = arith.constant 2 : index
    %c0_19 = arith.constant 0 : index
    %c0_20 = arith.constant 0 : index
    %19 = vector.load %arg2[%c0_18, %c2, %c0_19, %c0_20] : memref<1x8x32x128xbf16, #tpu.memory_space<vmem>>, vector<1x1x32x128xbf16>
    %20 = vector.shape_cast %19 : vector<1x1x32x128xbf16> to vector<32x128xbf16>
    %c0_21 = arith.constant 0 : index
    %c3 = arith.constant 3 : index
    %c0_22 = arith.constant 0 : index
    %c0_23 = arith.constant 0 : index
    %21 = vector.load %arg2[%c0_21, %c3, %c0_22, %c0_23] : memref<1x8x32x128xbf16, #tpu.memory_space<vmem>>, vector<1x1x32x128xbf16>
    %22 = vector.shape_cast %21 : vector<1x1x32x128xbf16> to vector<32x128xbf16>
    %23 = tpu.concatenate %20, %22 in 1 : vector<32x128xbf16>, vector<32x128xbf16> -> vector<32x256xbf16>
    %cst_24 = arith.constant dense<0.000000e+00> : vector<8x256xf32>
    %24 = tpu.matmul %0, %23, %cst_24 {dimension_numbers = #tpu.dot_dimension_numbers<[1], [0], [0], [1], [0, 0, 1, 1], [], []>} : vector<8x32xbf16>, vector<32x256xbf16>, vector<8x256xf32> -> vector<8x256xf32>
    %25 = arith.addf %24, %3 : vector<8x256xf32>
    %26 = vector.extract_strided_slice %25 {offsets = [0, 0], sizes = [8, 128], strides = [1, 1]} : vector<8x256xf32> to vector<8x128xf32>
    %c0_25 = arith.constant 0 : index
    %c2_26 = arith.constant 2 : index
    %c0_27 = arith.constant 0 : index
    %c0_28 = arith.constant 0 : index
    %27 = vector.load %arg5[%c0_25, %c2_26, %c0_27, %c0_28] : memref<1x8x8x128xf32, #tpu.memory_space<vmem>>, vector<1x1x8x128xf32>
    %28 = vector.shape_cast %27 : vector<1x1x8x128xf32> to vector<8x128xf32>
    %29 = vector.shape_cast %26 : vector<8x128xf32> to vector<1x1x8x128xf32>
    tpu.vector_store %arg5[%c0_25, %c2_26, %c0_27, %c0_28], %29 {strides = array<i32>} : memref<1x8x8x128xf32, #tpu.memory_space<vmem>>, vector<1x1x8x128xf32>,
    %30 = vector.extract_strided_slice %25 {offsets = [0, 128], sizes = [8, 128], strides = [1, 1]} : vector<8x256xf32> to vector<8x128xf32>
    %c0_29 = arith.constant 0 : index
    %c3_30 = arith.constant 3 : index
    %c0_31 = arith.constant 0 : index
    %c0_32 = arith.constant 0 : index
    %31 = vector.load %arg5[%c0_29, %c3_30, %c0_31, %c0_32] : memref<1x8x8x128xf32, #tpu.memory_space<vmem>>, vector<1x1x8x128xf32>
    %32 = vector.shape_cast %31 : vector<1x1x8x128xf32> to vector<8x128xf32>
    %33 = vector.shape_cast %30 : vector<8x128xf32> to vector<1x1x8x128xf32>
    tpu.vector_store %arg5[%c0_29, %c3_30, %c0_31, %c0_32], %33 {strides = array<i32>} : memref<1x8x8x128xf32, #tpu.memory_space<vmem>>, vector<1x1x8x128xf32>,
    %c0_33 = arith.constant 0 : index
    %c4 = arith.constant 4 : index
    %c0_34 = arith.constant 0 : index
    %c0_35 = arith.constant 0 : index
    %34 = vector.load %arg2[%c0_33, %c4, %c0_34, %c0_35] : memref<1x8x32x128xbf16, #tpu.memory_space<vmem>>, vector<1x1x32x128xbf16>
    %35 = vector.shape_cast %34 : vector<1x1x32x128xbf16> to vector<32x128xbf16>
    %c0_36 = arith.constant 0 : index
    %c5 = arith.constant 5 : index
    %c0_37 = arith.constant 0 : index
    %c0_38 = arith.constant 0 : index
    %36 = vector.load %arg2[%c0_36, %c5, %c0_37, %c0_38] : memref<1x8x32x128xbf16, #tpu.memory_space<vmem>>, vector<1x1x32x128xbf16>
    %37 = vector.shape_cast %36 : vector<1x1x32x128xbf16> to vector<32x128xbf16>
    %38 = tpu.concatenate %35, %37 in 1 : vector<32x128xbf16>, vector<32x128xbf16> -> vector<32x256xbf16>
    %cst_39 = arith.constant dense<0.000000e+00> : vector<8x256xf32>
    %39 = tpu.matmul %0, %38, %cst_39 {dimension_numbers = #tpu.dot_dimension_numbers<[1], [0], [0], [1], [0, 0, 1, 1], [], []>} : vector<8x32xbf16>, vector<32x256xbf16>, vector<8x256xf32> -> vector<8x256xf32>
    %40 = arith.addf %39, %3 : vector<8x256xf32>
    %41 = vector.extract_strided_slice %40 {offsets = [0, 0], sizes = [8, 128], strides = [1, 1]} : vector<8x256xf32> to vector<8x128xf32>
    %c0_40 = arith.constant 0 : index
    %c4_41 = arith.constant 4 : index
    %c0_42 = arith.constant 0 : index
    %c0_43 = arith.constant 0 : index
    %42 = vector.load %arg5[%c0_40, %c4_41, %c0_42, %c0_43] : memref<1x8x8x128xf32, #tpu.memory_space<vmem>>, vector<1x1x8x128xf32>
    %43 = vector.shape_cast %42 : vector<1x1x8x128xf32> to vector<8x128xf32>
    %44 = vector.shape_cast %41 : vector<8x128xf32> to vector<1x1x8x128xf32>
    tpu.vector_store %arg5[%c0_40, %c4_41, %c0_42, %c0_43], %44 {strides = array<i32>} : memref<1x8x8x128xf32, #tpu.memory_space<vmem>>, vector<1x1x8x128xf32>,
    %45 = vector.extract_strided_slice %40 {offsets = [0, 128], sizes = [8, 128], strides = [1, 1]} : vector<8x256xf32> to vector<8x128xf32>
    %c0_44 = arith.constant 0 : index
    %c5_45 = arith.constant 5 : index
    %c0_46 = arith.constant 0 : index
    %c0_47 = arith.constant 0 : index
    %46 = vector.load %arg5[%c0_44, %c5_45, %c0_46, %c0_47] : memref<1x8x8x128xf32, #tpu.memory_space<vmem>>, vector<1x1x8x128xf32>
    %47 = vector.shape_cast %46 : vector<1x1x8x128xf32> to vector<8x128xf32>
    %48 = vector.shape_cast %45 : vector<8x128xf32> to vector<1x1x8x128xf32>
    tpu.vector_store %arg5[%c0_44, %c5_45, %c0_46, %c0_47], %48 {strides = array<i32>} : memref<1x8x8x128xf32, #tpu.memory_space<vmem>>, vector<1x1x8x128xf32>,
    %c0_48 = arith.constant 0 : index
    %c6 = arith.constant 6 : index
    %c0_49 = arith.constant 0 : index
    %c0_50 = arith.constant 0 : index
    %49 = vector.load %arg2[%c0_48, %c6, %c0_49, %c0_50] : memref<1x8x32x128xbf16, #tpu.memory_space<vmem>>, vector<1x1x32x128xbf16>
    %50 = vector.shape_cast %49 : vector<1x1x32x128xbf16> to vector<32x128xbf16>
    %c0_51 = arith.constant 0 : index
    %c7 = arith.constant 7 : index
    %c0_52 = arith.constant 0 : index
    %c0_53 = arith.constant 0 : index
    %51 = vector.load %arg2[%c0_51, %c7, %c0_52, %c0_53] : memref<1x8x32x128xbf16, #tpu.memory_space<vmem>>, vector<1x1x32x128xbf16>
    %52 = vector.shape_cast %51 : vector<1x1x32x128xbf16> to vector<32x128xbf16>
    %53 = tpu.concatenate %50, %52 in 1 : vector<32x128xbf16>, vector<32x128xbf16> -> vector<32x256xbf16>
    %cst_54 = arith.constant dense<0.000000e+00> : vector<8x256xf32>
    %54 = tpu.matmul %0, %53, %cst_54 {dimension_numbers = #tpu.dot_dimension_numbers<[1], [0], [0], [1], [0, 0, 1, 1], [], []>} : vector<8x32xbf16>, vector<32x256xbf16>, vector<8x256xf32> -> vector<8x256xf32>
    %55 = arith.addf %54, %3 : vector<8x256xf32>
    %56 = vector.extract_strided_slice %55 {offsets = [0, 0], sizes = [8, 128], strides = [1, 1]} : vector<8x256xf32> to vector<8x128xf32>
    %c0_55 = arith.constant 0 : index
    %c6_56 = arith.constant 6 : index
    %c0_57 = arith.constant 0 : index
    %c0_58 = arith.constant 0 : index
    %57 = vector.load %arg5[%c0_55, %c6_56, %c0_57, %c0_58] : memref<1x8x8x128xf32, #tpu.memory_space<vmem>>, vector<1x1x8x128xf32>
    %58 = vector.shape_cast %57 : vector<1x1x8x128xf32> to vector<8x128xf32>
    %59 = vector.shape_cast %56 : vector<8x128xf32> to vector<1x1x8x128xf32>
    tpu.vector_store %arg5[%c0_55, %c6_56, %c0_57, %c0_58], %59 {strides = array<i32>} : memref<1x8x8x128xf32, #tpu.memory_space<vmem>>, vector<1x1x8x128xf32>,
    %60 = vector.extract_strided_slice %55 {offsets = [0, 128], sizes = [8, 128], strides = [1, 1]} : vector<8x256xf32> to vector<8x128xf32>
    %c0_59 = arith.constant 0 : index
    %c7_60 = arith.constant 7 : index
    %c0_61 = arith.constant 0 : index
    %c0_62 = arith.constant 0 : index
    %61 = vector.load %arg5[%c0_59, %c7_60, %c0_61, %c0_62] : memref<1x8x8x128xf32, #tpu.memory_space<vmem>>, vector<1x1x8x128xf32>
    %62 = vector.shape_cast %61 : vector<1x1x8x128xf32> to vector<8x128xf32>
    %63 = vector.shape_cast %60 : vector<8x128xf32> to vector<1x1x8x128xf32>
    tpu.vector_store %arg5[%c0_59, %c7_60, %c0_61, %c0_62], %63 {strides = array<i32>} : memref<1x8x8x128xf32, #tpu.memory_space<vmem>>, vector<1x1x8x128xf32>,
    return
  }
  func.func @transform_0(%arg0: i32, %arg1: i32) -> (i32, i32, i32, i32) {
    %c0_i32 = arith.constant 0 : i32
    %c0_i32_0 = arith.constant 0 : i32
    %c0_i32_1 = arith.constant 0 : i32
    return %arg0, %arg1, %c0_i32, %c0_i32_0 : i32, i32, i32, i32
  }
  func.func @transform_1(%arg0: i32, %arg1: i32) -> (i32, i32) {
    %c0_i32 = arith.constant 0 : i32
    %c0_i32_0 = arith.constant 0 : i32
    %c0_i32_1 = arith.constant 0 : i32
    return %c0_i32, %c0_i32_0 : i32, i32
  }
  func.func @transform_2(%arg0: i32, %arg1: i32) -> (i32, i32) {
    %c0_i32 = arith.constant 0 : i32
    %c0_i32_0 = arith.constant 0 : i32
    %c0_i32_1 = arith.constant 0 : i32
    return %c0_i32, %c0_i32_0 : i32, i32
  }
  func.func @transform_3(%arg0: i32, %arg1: i32) -> (i32, i32, i32, i32) {
    %c0_i32 = arith.constant 0 : i32
    %c0_i32_0 = arith.constant 0 : i32
    %c0_i32_1 = arith.constant 0 : i32
    return %arg0, %arg1, %c0_i32, %c0_i32_0 : i32, i32, i32, i32
  }
}

module attributes {stable_mosaic.version = 11 : i64} {
  func.func @crf_viterbi_kernel(%arg0: i32, %arg1: memref<1xi32, #tpu.memory_space<smem>>, %arg2: memref<1x1x128xi32, #tpu.memory_space<vmem>>, %arg3: memref<1x8x8x128xf32, #tpu.memory_space<vmem>>, %arg4: memref<8x1xf32, #tpu.memory_space<vmem>>, %arg5: memref<8x1xf32, #tpu.memory_space<vmem>>, %arg6: memref<8x8xf32, #tpu.memory_space<vmem>>, %arg7: memref<1x8x128xi32, #tpu.memory_space<vmem>>, %arg8: memref<8x128xi32, #tpu.memory_space<vmem>>) attributes {dimension_semantics = [#tpu.dimension_semantics<parallel>], iteration_bounds = array<i64: 1>, scalar_prefetch = 1 : i64, scratch_operands = 1 : i64, tpu.core_type = #tpu.core_type<tc>, window_params = [{transform_indices = @transform_0, window_bounds = array<i64: 1, 1, 128>}, {transform_indices = @transform_1, window_bounds = array<i64: 1, 8, 8, 128>}, {pipeline_mode = #tpu.pipeline_mode<synchronous>, transform_indices = @transform_2, window_bounds = array<i64: 8, 1>}, {pipeline_mode = #tpu.pipeline_mode<synchronous>, transform_indices = @transform_3, window_bounds = array<i64: 8, 1>}, {pipeline_mode = #tpu.pipeline_mode<synchronous>, transform_indices = @transform_4, window_bounds = array<i64: 8, 8>}, {transform_indices = @transform_5, window_bounds = array<i64: 1, 8, 128>}]} {
    %0 = arith.index_cast %arg0 : i32 to index
    %1 = memref.load %arg1[%0] : memref<1xi32, #tpu.memory_space<smem>>
    %c0 = arith.constant 0 : index
    %c0_0 = arith.constant 0 : index
    %c0_1 = arith.constant 0 : index
    %2 = vector.load %arg2[%c0, %c0_0, %c0_1] : memref<1x1x128xi32, #tpu.memory_space<vmem>>, vector<1x1x128xi32>
    %3 = vector.shape_cast %2 : vector<1x1x128xi32> to vector<1x128xi32>
    %c0_2 = arith.constant 0 : index
    %c0_3 = arith.constant 0 : index
    %4 = vector.load %arg6[%c0_2, %c0_3] : memref<8x8xf32, #tpu.memory_space<vmem>>, vector<8x8xf32>
    %5 = tpu.iota {dimensions = array<i32: 0>} : vector<8x128xi32>
    %6 = vector.extract_strided_slice %4 {offsets = [0, 0], sizes = [8, 1], strides = [1, 1]} : vector<8x8xf32> to vector<8x1xf32>
    %7 = vector.shape_cast %6 : vector<8x1xf32> to vector<8x1xf32>
    %8 = vector.broadcast %7 : vector<8x1xf32> to vector<8x128xf32>
    %9 = vector.extract_strided_slice %4 {offsets = [0, 1], sizes = [8, 1], strides = [1, 1]} : vector<8x8xf32> to vector<8x1xf32>
    %10 = vector.shape_cast %9 : vector<8x1xf32> to vector<8x1xf32>
    %11 = vector.broadcast %10 : vector<8x1xf32> to vector<8x128xf32>
    %12 = vector.extract_strided_slice %4 {offsets = [0, 2], sizes = [8, 1], strides = [1, 1]} : vector<8x8xf32> to vector<8x1xf32>
    %13 = vector.shape_cast %12 : vector<8x1xf32> to vector<8x1xf32>
    %14 = vector.broadcast %13 : vector<8x1xf32> to vector<8x128xf32>
    %cst = arith.constant -1.000000e+30 : f32
    %15 = vector.broadcast %cst : f32 to vector<5x128xf32>
    %c0_4 = arith.constant 0 : index
    %c0_5 = arith.constant 0 : index
    %16 = vector.load %arg4[%c0_4, %c0_5] : memref<8x1xf32, #tpu.memory_space<vmem>>, vector<8x1xf32>
    %c0_6 = arith.constant 0 : index
    %c0_7 = arith.constant 0 : index
    %c0_8 = arith.constant 0 : index
    %c0_9 = arith.constant 0 : index
    %17 = vector.load %arg3[%c0_6, %c0_7, %c0_8, %c0_9] : memref<1x8x8x128xf32, #tpu.memory_space<vmem>>, vector<1x1x8x128xf32>
    %18 = vector.shape_cast %17 : vector<1x1x8x128xf32> to vector<8x128xf32>
    %19 = vector.broadcast %16 : vector<8x1xf32> to vector<8x128xf32>
    %20 = arith.addf %19, %18 : vector<8x128xf32>
    %c1_i32 = arith.constant 1 : i32
    %21 = arith.subi %1, %c1_i32 : i32
    %22 = arith.addi %c1_i32, %21 : i32
    %c1_i32_10 = arith.constant 1 : i32
    %23 = scf.for %arg9 = %c1_i32 to %22 step %c1_i32_10 iter_args(%arg10 = %20) -> (vector<8x128xf32>)  : i32 {
      %c0_i32_21 = arith.constant 0 : i32
      %43 = vector.broadcast %c0_i32_21 : i32 to vector<1x128xi32>
      %44 = arith.addf %arg10, %8 : vector<8x128xf32>
      %cst_22 = arith.constant dense<0xFF800000> : vector<128xf32>
      %45 = vector.multi_reduction <maximumf>, %44, %cst_22 [0] : vector<8x128xf32> to vector<128xf32>
      %46 = vector.shape_cast %45 : vector<128xf32> to vector<1x128xf32>
      %47 = vector.broadcast %46 : vector<1x128xf32> to vector<8x128xf32>
      %48 = arith.cmpf oeq, %44, %47 : vector<8x128xf32>
      %c7_i32_23 = arith.constant 7 : i32
      %49 = vector.broadcast %c7_i32_23 : i32 to vector<8x128xi32>
      %50 = arith.select %48, %5, %49 : vector<8x128xi1>, vector<8x128xi32>
      %cst_24 = arith.constant dense<2147483647> : vector<128xi32>
      %51 = vector.multi_reduction <minsi>, %50, %cst_24 [0] : vector<8x128xi32> to vector<128xi32>
      %52 = vector.shape_cast %51 : vector<128xi32> to vector<1x128xi32>
      %c0_i32_25 = arith.constant 0 : i32
      %53 = vector.broadcast %c0_i32_25 : i32 to vector<1x128xi32>
      %54 = arith.shli %52, %53 : vector<1x128xi32>
      %55 = arith.ori %43, %54 : vector<1x128xi32>
      %56 = arith.addf %arg10, %11 : vector<8x128xf32>
      %cst_26 = arith.constant dense<0xFF800000> : vector<128xf32>
      %57 = vector.multi_reduction <maximumf>, %56, %cst_26 [0] : vector<8x128xf32> to vector<128xf32>
      %58 = vector.shape_cast %57 : vector<128xf32> to vector<1x128xf32>
      %59 = vector.broadcast %58 : vector<1x128xf32> to vector<8x128xf32>
      %60 = arith.cmpf oeq, %56, %59 : vector<8x128xf32>
      %c7_i32_27 = arith.constant 7 : i32
      %61 = vector.broadcast %c7_i32_27 : i32 to vector<8x128xi32>
      %62 = arith.select %60, %5, %61 : vector<8x128xi1>, vector<8x128xi32>
      %cst_28 = arith.constant dense<2147483647> : vector<128xi32>
      %63 = vector.multi_reduction <minsi>, %62, %cst_28 [0] : vector<8x128xi32> to vector<128xi32>
      %64 = vector.shape_cast %63 : vector<128xi32> to vector<1x128xi32>
      %c3_i32 = arith.constant 3 : i32
      %65 = vector.broadcast %c3_i32 : i32 to vector<1x128xi32>
      %66 = arith.shli %64, %65 : vector<1x128xi32>
      %67 = arith.ori %55, %66 : vector<1x128xi32>
      %68 = arith.addf %arg10, %14 : vector<8x128xf32>
      %cst_29 = arith.constant dense<0xFF800000> : vector<128xf32>
      %69 = vector.multi_reduction <maximumf>, %68, %cst_29 [0] : vector<8x128xf32> to vector<128xf32>
      %70 = vector.shape_cast %69 : vector<128xf32> to vector<1x128xf32>
      %71 = vector.broadcast %70 : vector<1x128xf32> to vector<8x128xf32>
      %72 = arith.cmpf oeq, %68, %71 : vector<8x128xf32>
      %c7_i32_30 = arith.constant 7 : i32
      %73 = vector.broadcast %c7_i32_30 : i32 to vector<8x128xi32>
      %74 = arith.select %72, %5, %73 : vector<8x128xi1>, vector<8x128xi32>
      %cst_31 = arith.constant dense<2147483647> : vector<128xi32>
      %75 = vector.multi_reduction <minsi>, %74, %cst_31 [0] : vector<8x128xi32> to vector<128xi32>
      %76 = vector.shape_cast %75 : vector<128xi32> to vector<1x128xi32>
      %c6_i32 = arith.constant 6 : i32
      %77 = vector.broadcast %c6_i32 : i32 to vector<1x128xi32>
      %78 = arith.shli %76, %77 : vector<1x128xi32>
      %79 = arith.ori %67, %78 : vector<1x128xi32>
      %80 = tpu.concatenate %46, %58, %70, %15 in 0 : vector<1x128xf32>, vector<1x128xf32>, vector<1x128xf32>, vector<5x128xf32> -> vector<8x128xf32>
      %c0_32 = arith.constant 0 : index
      %81 = arith.index_cast %arg9 : i32 to index
      %c0_33 = arith.constant 0 : index
      %c0_34 = arith.constant 0 : index
      %82 = vector.load %arg3[%c0_32, %81, %c0_33, %c0_34] : memref<1x8x8x128xf32, #tpu.memory_space<vmem>>, vector<1x1x8x128xf32>
      %83 = vector.shape_cast %82 : vector<1x1x8x128xf32> to vector<8x128xf32>
      %84 = arith.addf %80, %83 : vector<8x128xf32>
      %85 = arith.index_cast %arg9 : i32 to index
      %c0_35 = arith.constant 0 : index
      %86 = vector.load %arg8[%85, %c0_35] : memref<8x128xi32, #tpu.memory_space<vmem>>, vector<1x128xi32>
      tpu.vector_store %arg8[%85, %c0_35], %79 {strides = array<i32>} : memref<8x128xi32, #tpu.memory_space<vmem>>, vector<1x128xi32>,
      %87 = vector.broadcast %arg9 : i32 to vector<1x128xi32>
      %88 = arith.cmpi slt, %87, %3 : vector<1x128xi32>
      %89 = vector.shape_cast %88 : vector<1x128xi1> to vector<1x128xi1>
      %90 = vector.broadcast %89 : vector<1x128xi1> to vector<8x128xi1>
      %91 = arith.select %90, %84, %arg10 : vector<8x128xi1>, vector<8x128xf32>
      scf.yield %91 : vector<8x128xf32>
    }
    %c0_11 = arith.constant 0 : index
    %c0_12 = arith.constant 0 : index
    %24 = vector.load %arg5[%c0_11, %c0_12] : memref<8x1xf32, #tpu.memory_space<vmem>>, vector<8x1xf32>
    %25 = vector.broadcast %24 : vector<8x1xf32> to vector<8x128xf32>
    %26 = arith.addf %23, %25 : vector<8x128xf32>
    %cst_13 = arith.constant dense<0xFF800000> : vector<128xf32>
    %27 = vector.multi_reduction <maximumf>, %26, %cst_13 [0] : vector<8x128xf32> to vector<128xf32>
    %28 = vector.shape_cast %27 : vector<128xf32> to vector<1x128xf32>
    %29 = vector.broadcast %28 : vector<1x128xf32> to vector<8x128xf32>
    %30 = arith.cmpf oeq, %26, %29 : vector<8x128xf32>
    %c7_i32 = arith.constant 7 : i32
    %31 = vector.broadcast %c7_i32 : i32 to vector<8x128xi32>
    %32 = arith.select %30, %5, %31 : vector<8x128xi1>, vector<8x128xi32>
    %cst_14 = arith.constant dense<2147483647> : vector<128xi32>
    %33 = vector.multi_reduction <minsi>, %32, %cst_14 [0] : vector<8x128xi32> to vector<128xi32>
    %34 = vector.shape_cast %33 : vector<128xi32> to vector<1x128xi32>
    %c0_i32 = arith.constant 0 : i32
    %35 = vector.broadcast %c0_i32 : i32 to vector<8x128xi32>
    %c0_15 = arith.constant 0 : index
    %c0_16 = arith.constant 0 : index
    %c0_17 = arith.constant 0 : index
    %36 = vector.load %arg7[%c0_15, %c0_16, %c0_17] : memref<1x8x128xi32, #tpu.memory_space<vmem>>, vector<1x8x128xi32>
    %37 = vector.shape_cast %36 : vector<1x8x128xi32> to vector<8x128xi32>
    %38 = vector.shape_cast %35 : vector<8x128xi32> to vector<1x8x128xi32>
    tpu.vector_store %arg7[%c0_15, %c0_16, %c0_17], %38 {strides = array<i32>} : memref<1x8x128xi32, #tpu.memory_space<vmem>>, vector<1x8x128xi32>,
    %c0_i32_18 = arith.constant 0 : i32
    %39 = vector.broadcast %c0_i32_18 : i32 to vector<1x128xi32>
    %c0_i32_19 = arith.constant 0 : i32
    %40 = arith.subi %1, %c0_i32_19 : i32
    %41 = arith.addi %c0_i32_19, %40 : i32
    %c1_i32_20 = arith.constant 1 : i32
    %42 = scf.for %arg9 = %c0_i32_19 to %41 step %c1_i32_20 iter_args(%arg10 = %39) -> (vector<1x128xi32>)  : i32 {
      %c1_i32_21 = arith.constant 1 : i32
      %43 = arith.subi %1, %c1_i32_21 : i32
      %44 = arith.subi %43, %arg9 : i32
      %c1_i32_22 = arith.constant 1 : i32
      %45 = arith.addi %44, %c1_i32_22 : i32
      %c7_i32_23 = arith.constant 7 : i32
      %46 = arith.minsi %45, %c7_i32_23 : i32
      %47 = arith.index_cast %46 : i32 to index
      %c0_24 = arith.constant 0 : index
      %48 = vector.load %arg8[%47, %c0_24] : memref<8x128xi32, #tpu.memory_space<vmem>>, vector<1x128xi32>
      %c3_i32 = arith.constant 3 : i32
      %49 = vector.broadcast %c3_i32 : i32 to vector<1x128xi32>
      %50 = arith.muli %49, %arg10 : vector<1x128xi32>
      %51 = arith.shrui %48, %50 : vector<1x128xi32>
      %c7_i32_25 = arith.constant 7 : i32
      %52 = vector.broadcast %c7_i32_25 : i32 to vector<1x128xi32>
      %53 = arith.andi %51, %52 : vector<1x128xi32>
      %c1_i32_26 = arith.constant 1 : i32
      %54 = vector.broadcast %c1_i32_26 : i32 to vector<1x128xi32>
      %55 = arith.subi %3, %54 : vector<1x128xi32>
      %56 = vector.broadcast %44 : i32 to vector<1x128xi32>
      %57 = arith.cmpi eq, %56, %55 : vector<1x128xi32>
      %c1_i32_27 = arith.constant 1 : i32
      %58 = vector.broadcast %c1_i32_27 : i32 to vector<1x128xi32>
      %59 = arith.subi %3, %58 : vector<1x128xi32>
      %60 = vector.broadcast %44 : i32 to vector<1x128xi32>
      %61 = arith.cmpi slt, %60, %59 : vector<1x128xi32>
      %c0_i32_28 = arith.constant 0 : i32
      %62 = vector.broadcast %c0_i32_28 : i32 to vector<1x128xi32>
      %63 = arith.select %61, %53, %62 : vector<1x128xi1>, vector<1x128xi32>
      %64 = arith.select %57, %34, %63 : vector<1x128xi1>, vector<1x128xi32>
      %65 = vector.broadcast %44 : i32 to vector<1x128xi32>
      %66 = arith.cmpi slt, %65, %3 : vector<1x128xi32>
      %c0_i32_29 = arith.constant 0 : i32
      %67 = vector.broadcast %c0_i32_29 : i32 to vector<1x128xi32>
      %68 = arith.select %66, %64, %67 : vector<1x128xi1>, vector<1x128xi32>
      %c0_30 = arith.constant 0 : index
      %69 = arith.index_cast %44 : i32 to index
      %c0_31 = arith.constant 0 : index
      %70 = vector.load %arg7[%c0_30, %69, %c0_31] : memref<1x8x128xi32, #tpu.memory_space<vmem>>, vector<1x1x128xi32>
      %71 = vector.shape_cast %70 : vector<1x1x128xi32> to vector<1x128xi32>
      %72 = vector.shape_cast %68 : vector<1x128xi32> to vector<1x1x128xi32>
      tpu.vector_store %arg7[%c0_30, %69, %c0_31], %72 {strides = array<i32>} : memref<1x8x128xi32, #tpu.memory_space<vmem>>, vector<1x1x128xi32>,
      scf.yield %64 : vector<1x128xi32>
    }
    return
  }
  func.func @transform_0(%arg0: i32, %arg1: memref<1xi32, #tpu.memory_space<smem>>) -> (i32, i32, i32) {
    %c0_i32 = arith.constant 0 : i32
    %c0_i32_0 = arith.constant 0 : i32
    %c0_i32_1 = arith.constant 0 : i32
    return %arg0, %c0_i32, %c0_i32_0 : i32, i32, i32
  }
  func.func @transform_1(%arg0: i32, %arg1: memref<1xi32, #tpu.memory_space<smem>>) -> (i32, i32, i32, i32) {
    %c0_i32 = arith.constant 0 : i32
    %c0_i32_0 = arith.constant 0 : i32
    %c0_i32_1 = arith.constant 0 : i32
    %c0_i32_2 = arith.constant 0 : i32
    return %arg0, %c0_i32, %c0_i32_0, %c0_i32_1 : i32, i32, i32, i32
  }
  func.func @transform_2(%arg0: i32, %arg1: memref<1xi32, #tpu.memory_space<smem>>) -> (i32, i32) {
    %c0_i32 = arith.constant 0 : i32
    %c0_i32_0 = arith.constant 0 : i32
    %c0_i32_1 = arith.constant 0 : i32
    return %c0_i32, %c0_i32_0 : i32, i32
  }
  func.func @transform_3(%arg0: i32, %arg1: memref<1xi32, #tpu.memory_space<smem>>) -> (i32, i32) {
    %c0_i32 = arith.constant 0 : i32
    %c0_i32_0 = arith.constant 0 : i32
    %c0_i32_1 = arith.constant 0 : i32
    return %c0_i32, %c0_i32_0 : i32, i32
  }
  func.func @transform_4(%arg0: i32, %arg1: memref<1xi32, #tpu.memory_space<smem>>) -> (i32, i32) {
    %c0_i32 = arith.constant 0 : i32
    %c0_i32_0 = arith.constant 0 : i32
    %c0_i32_1 = arith.constant 0 : i32
    return %c0_i32, %c0_i32_0 : i32, i32
  }
  func.func @transform_5(%arg0: i32, %arg1: memref<1xi32, #tpu.memory_space<smem>>) -> (i32, i32, i32) {
    %c0_i32 = arith.constant 0 : i32
    %c0_i32_0 = arith.constant 0 : i32
    %c0_i32_1 = arith.constant 0 : i32
    return %arg0, %c0_i32, %c0_i32_0 : i32, i32, i32
  }
}

</mosaic_0001>

<llo_original>
// kernel: _bert_crf_decode_impl.3
$region0: #{_bert_crf_decode_impl.3}
  #allocation0 [shape = 'u32[]', space=smem, size = 0x4, offset = 0x4, fixed_abs, tag = 'smem constant byte address 0x4 - core index']
  #allocation1 [shape = 'u32[144,128]{1,0:T(1,128)}', space=vmem, size = 0x12000, scoped, tag = 'internal scratch']
  #allocation2 [shape = 's32[8,128]{1,0:T(8,128)}', space=vmem, size = 0x1000, scoped, tag = 'scratch operand']
  #allocation3 [shape = 's32[1]{0}', space=sflag, size = 0x4, scoped, tag = 'scoped memory for _bert_crf_decode_impl.3']
  #allocation4 [shape = 's32[1]{0:T(128)S(6)}', space=smem, size = 0x200, scoped, tag = 'prefetched SMEM operand 0']
  %s0 = inlined_call_operand.<no memory space> [shape: s32[1], index: 0, kind: input, shape index: {}]
  %s1 = inlined_call_operand.vmem [shape: s32[1,1,128], index: 1, kind: input, shape index: {}]
  %s2 = inlined_call_operand.vmem [shape: f32[1,8,8,128], index: 2, kind: input, shape index: {}]
  %s3 = inlined_call_operand.vmem [shape: f32[8,1], index: 3, kind: input, shape index: {}]
  %s4 = inlined_call_operand.vmem [shape: f32[8,1], index: 4, kind: input, shape index: {}]
  %s5 = inlined_call_operand.vmem [shape: f32[8,8], index: 5, kind: input, shape index: {}]
  %s6 = inlined_call_operand.vmem [shape: s32[1,8,128], index: 6, kind: output, shape index: {}]
  %s7 = sld [smem:[#allocation0]]
  $region44: #{_bert_crf_decode_impl.3} parent=0
    _
  %s9 = ssub.s32 1, %s7
  %s10 = scalar_select 0, %s9, %s7
  %11 = sst [smem:[#allocation4]] %s0
  // Predicated region
  $region2: #{_bert_crf_decode_impl.3} parent=0 // pred_check
    _
  $region3: #{_bert_crf_decode_impl.3} parent=0 // pred_check_branch
    %13 = sbr.rel (0) target = $region5
  $region4: #{_bert_crf_decode_impl.3} parent=0 // pred_region
    _
  $region5: #{_bert_crf_decode_impl.3} parent=0 // pred_fallthru
    _
  // Predicated region
  $region6: #{_bert_crf_decode_impl.3} parent=0 // pred_check
    _
  $region7: #{_bert_crf_decode_impl.3} parent=0 // pred_check_branch
    %15 = sbr.rel (0) target = $region9
  $region8: #{_bert_crf_decode_impl.3} parent=0 // pred_region
    _
  $region9: #{_bert_crf_decode_impl.3} parent=0 // pred_fallthru
    _
  // Predicated region
  $region10: #{_bert_crf_decode_impl.3} parent=0 // pred_check
    _
  $region11: #{_bert_crf_decode_impl.3} parent=0 // pred_check_branch
    %17 = sbr.rel (0) target = $region13
  $region12: #{_bert_crf_decode_impl.3} parent=0 // pred_region
    _
  $region13: #{_bert_crf_decode_impl.3} parent=0 // pred_fallthru
    _
  // Predicated region
  $region14: #{_bert_crf_decode_impl.3} parent=0 // pred_check
    _
  $region15: #{_bert_crf_decode_impl.3} parent=0 // pred_check_branch
    %19 = sbr.rel (0) target = $region17
  $region16: #{_bert_crf_decode_impl.3} parent=0 // pred_region
    _
  $region17: #{_bert_crf_decode_impl.3} parent=0 // pred_fallthru
    _
  // Predicated region
  $region18: #{_bert_crf_decode_impl.3} parent=0 // pred_check
    _
  $region19: #{_bert_crf_decode_impl.3} parent=0 // pred_check_branch
    %21 = sbr.rel (0) target = $region21
  $region20: #{_bert_crf_decode_impl.3} parent=0 // pred_region
    _
  $region21: #{_bert_crf_decode_impl.3} parent=0 // pred_fallthru
    _
  %s22 = sld [smem:[#allocation4]]
  %v23 = vld [vmem:[%s1] sm:$0x1]
  %v24 = vld [vmem:[%s5] sm:$0xff]
  %v25 = vlaneseq
  %v26 = vshrl.u32 %v25, 7
  %28 = vset.pattern.permute.xlu0 0
  %29 = vperm.xlu0 %28, %v24
  %v30 = vpop.permute.xlu0 %29
  %32 = vset.pattern.permute.xlu0 1
  %33 = vperm.xlu0 %32, %v24
  %v34 = vpop.permute.xlu0 %33
  %36 = vset.pattern.permute.xlu0 2
  %37 = vperm.xlu0 %36, %v24
  %v38 = vpop.permute.xlu0 %37
  %v40 = vld [vmem:[%s3] sm:$0xff]
  %v41 = vld [vmem:[%s2] sm:$0xff]
  %43 = vset.pattern.permute.xlu0 0
  %44 = vperm.xlu0 %43, %v40
  %v45 = vpop.permute.xlu0 %44
  %v47 = vadd.f32 %v45, %v41
  // While loop
  $region22: #{_bert_crf_decode_impl.3} parent=0 // loop_pre_header
    _
  $region23: #{_bert_crf_decode_impl.3} parent=0 // loop_header
    %s49 = sphi 1, %s51
    %p50 = scmp.ge.s32.totalorder %s49, %s22
    %v54 = vphi %v47, %v133
  $region24: #{_bert_crf_decode_impl.3} parent=0 // loop_header_branch
    %53 = sbr.rel (%p50) target = $region28
  $region25: #{_bert_crf_decode_impl.3} parent=0 // loop_body
    %v55 = vadd.f32 %v54, %v30
    %v56 = vrot.slane %v55, 4
    %v57 = vmax.f32 %v55, %v56
    %v58 = vrot.slane %v57, 2
    %v59 = vmax.f32 %v57, %v58
    %v60 = vrot.slane %v59, 1
    %v61 = vmax.f32 %v59, %v60
    %vm62 = vcmp.eq.f32.partialorder %v55, %v61
    %v63 = vsel %vm62, %v26, 7
    %v64 = vrot.slane %v63, 4
    %vm65 = vcmp.lt.s32.totalorder %v63, %v64
    %v66 = vsel %vm65, %v63, %v64
    %v67 = vrot.slane %v66, 2
    %vm68 = vcmp.lt.s32.totalorder %v66, %v67
    %v69 = vsel %vm68, %v66, %v67
    %v70 = vrot.slane %v69, 1
    %vm71 = vcmp.lt.s32.totalorder %v69, %v70
    %v72 = vsel %vm71, %v69, %v70
    %v73 = vadd.f32 %v54, %v34
    %v74 = vrot.slane %v73, 4
    %v75 = vmax.f32 %v73, %v74
    %v76 = vrot.slane %v75, 2
    %v77 = vmax.f32 %v75, %v76
    %v78 = vrot.slane %v77, 1
    %v79 = vmax.f32 %v77, %v78
    %vm80 = vcmp.eq.f32.partialorder %v73, %v79
    %v81 = vsel %vm80, %v26, 7
    %v82 = vrot.slane %v81, 4
    %vm83 = vcmp.lt.s32.totalorder %v81, %v82
    %v84 = vsel %vm83, %v81, %v82
    %v85 = vrot.slane %v84, 2
    %vm86 = vcmp.lt.s32.totalorder %v84, %v85
    %v87 = vsel %vm86, %v84, %v85
    %v88 = vrot.slane %v87, 1
    %vm89 = vcmp.lt.s32.totalorder %v87, %v88
    %v90 = vsel %vm89, %v87, %v88
    %v91 = vshll.u32 %v90, 3
    %v92 = vor.u32 %v72, %v91
    %v93 = vadd.f32 %v54, %v38
    %v94 = vrot.slane %v93, 4
    %v95 = vmax.f32 %v93, %v94
    %v96 = vrot.slane %v95, 2
    %v97 = vmax.f32 %v95, %v96
    %v98 = vrot.slane %v97, 1
    %v99 = vmax.f32 %v97, %v98
    %vm100 = vcmp.eq.f32.partialorder %v93, %v99
    %v101 = vsel %vm100, %v26, 7
    %v102 = vrot.slane %v101, 4
    %vm103 = vcmp.lt.s32.totalorder %v101, %v102
    %v104 = vsel %vm103, %v101, %v102
    %v105 = vrot.slane %v104, 2
    %vm106 = vcmp.lt.s32.totalorder %v104, %v105
    %v107 = vsel %vm106, %v104, %v105
    %v108 = vrot.slane %v107, 1
    %vm109 = vcmp.lt.s32.totalorder %v107, %v108
    %v110 = vsel %vm109, %v107, %v108
    %v111 = vshll.u32 %v110, 6
    %v112 = vor.u32 %v92, %v111
    %vm113 = vcmask 1040384
    %v114 = vsel %vm113, %v61, %v79
    %vm115 = vcmask 1041408
    %v116 = vsel %vm115, %v114, %v99
    %vm117 = vcmask 1042432
    %v118 = vsel %vm117, %v116, -1e+30
    %s119 = smul.u32 %s49, 8
    %s120 = scalar_lea.vmem %s2, %s119
    %v121 = vld [vmem:[%s120] sm:$0xff]
    %v122 = vadd.f32 %v118, %v121
    %s123 = scalar_lea.vmem [#allocation2], %s49
    %124 = vst [vmem:[%s123] sm:$0x1] %v112
    %v125 = vstv %s49
    %vm126 = vcmp.lt.s32.totalorder %v125, %v23
    %v127 = vsel %vm126, 1, 0
    %v128 = vlaneseq
    %v129 = vshrl.u32 %v128, 7
    %v130 = vsub.s32 0, %v129
    %v131 = vrot.slane %v127, %v130
    %vm132 = vcmp.eq.s32.totalorder %v131, 1
    %v133 = vsel %vm132, %v122, %v54
  $region26: #{_bert_crf_decode_impl.3} parent=0 // loop_footer
    %s51 = sadd.s32 %s49, 1
  $region27: #{_bert_crf_decode_impl.3} parent=0 // loop_footer_branch
    %48 = sbr.rel target = $region23
  $region28: #{_bert_crf_decode_impl.3} parent=0 // loop_exit
    _
  %v134 = vld [vmem:[%s4] sm:$0xff]
  %136 = vset.pattern.permute.xlu0 0
  %137 = vperm.xlu0 %136, %v134
  %v138 = vpop.permute.xlu0 %137
  %v140 = vadd.f32 %v54, %v138
  %v141 = vrot.slane %v140, 4
  %v142 = vmax.f32 %v140, %v141
  %v143 = vrot.slane %v142, 2
  %v144 = vmax.f32 %v142, %v143
  %v145 = vrot.slane %v144, 1
  %v146 = vmax.f32 %v144, %v145
  %vm147 = vcmp.eq.f32.partialorder %v140, %v146
  %v148 = vsel %vm147, %v26, 7
  %v149 = vrot.slane %v148, 4
  %vm150 = vcmp.lt.s32.totalorder %v148, %v149
  %v151 = vsel %vm150, %v148, %v149
  %v152 = vrot.slane %v151, 2
  %vm153 = vcmp.lt.s32.totalorder %v151, %v152
  %v154 = vsel %vm153, %v151, %v152
  %v155 = vrot.slane %v154, 1
  %vm156 = vcmp.lt.s32.totalorder %v154, %v155
  %v157 = vsel %vm156, %v154, %v155
  %158 = vst [vmem:[%s6] sm:$0xff] 0
  // While loop
  $region29: #{_bert_crf_decode_impl.3} parent=0 // loop_pre_header
    _
  $region30: #{_bert_crf_decode_impl.3} parent=0 // loop_header
    %s160 = sphi 0, %s162
    %p161 = scmp.ge.s32.totalorder %s160, %s22
    %v165 = vphi 0, %v181
  $region31: #{_bert_crf_decode_impl.3} parent=0 // loop_header_branch
    %164 = sbr.rel (%p161) target = $region35
  $region32: #{_bert_crf_decode_impl.3} parent=0 // loop_body
    %s166 = ssub.s32 %s22, 1
    %s167 = ssub.s32 %s166, %s160
    %s168 = sadd.s32 %s167, 1
    %p169 = scmp.lt.s32.totalorder %s168, 7
    %s170 = scalar_select %p169, %s168, 7
    %s171 = scalar_lea.vmem [#allocation2], %s170
    %v172 = vld [vmem:[%s171] sm:$0x1]
    %v173 = vmul.u32 %v165, 3
    %v174 = vshrl.u32 %v172, %v173
    %v175 = vand.u32 %v174, 7
    %v176 = vsub.s32 %v23, 1
    %v177 = vstv %s167
    %vm178 = vcmp.eq.s32.totalorder %v177, %v176
    %vm179 = vcmp.lt.s32.totalorder %v177, %v176
    %v180 = vsel %vm179, %v175, 0
    %v181 = vsel %vm178, %v157, %v180
    %vm182 = vcmp.lt.s32.totalorder %v177, %v23
    %v183 = vsel %vm182, %v181, 0
    %s184 = scalar_lea.vmem %s6, %s167
    %185 = vst [vmem:[%s184] sm:$0x1] %v183
  $region33: #{_bert_crf_decode_impl.3} parent=0 // loop_footer
    %s162 = sadd.s32 %s160, 1
  $region34: #{_bert_crf_decode_impl.3} parent=0 // loop_footer_branch
    %159 = sbr.rel target = $region30
  $region35: #{_bert_crf_decode_impl.3} parent=0 // loop_exit
    _
  // Predicated region
  $region36: #{_bert_crf_decode_impl.3} parent=0 // pred_check
    _
  $region37: #{_bert_crf_decode_impl.3} parent=0 // pred_check_branch
    %187 = sbr.rel (0) target = $region39
  $region38: #{_bert_crf_decode_impl.3} parent=0 // pred_region
    _
  $region39: #{_bert_crf_decode_impl.3} parent=0 // pred_fallthru
    _
  // Predicated region
  $region40: #{_bert_crf_decode_impl.3} parent=0 // pred_check
    _
  $region41: #{_bert_crf_decode_impl.3} parent=0 // pred_check_branch
    %189 = sbr.rel (0) target = $region43
  $region42: #{_bert_crf_decode_impl.3} parent=0 // pred_region
    _
  $region43: #{_bert_crf_decode_impl.3} parent=0 // pred_fallthru
    _

// kernel: _bert_crf_decode_impl.2
$region0: #{_bert_crf_decode_impl.2}
  #allocation0 [shape = 'u32[]', space=smem, size = 0x4, offset = 0x4, fixed_abs, tag = 'smem constant byte address 0x4 - core index']
  #allocation1 [shape = 'u32[144,128]{1,0:T(1,128)}', space=vmem, size = 0x12000, scoped, tag = 'internal scratch']
  %s0 = inlined_call_operand.vmem [shape: bf16[1,8,32,128], index: 0, kind: input, shape index: {}]
  %s1 = inlined_call_operand.vmem [shape: bf16[8,32], index: 1, kind: input, shape index: {}]
  %s2 = inlined_call_operand.vmem [shape: f32[8,1], index: 2, kind: input, shape index: {}]
  %s3 = inlined_call_operand.vmem [shape: f32[1,8,8,128], index: 3, kind: output, shape index: {}]
  %s4 = sld [smem:[#allocation0]]
  $region22: #{_bert_crf_decode_impl.2} parent=0
    _
  %s6 = ssub.s32 1, %s4
  %s7 = scalar_select 0, %s6, %s4
  // Predicated region
  $region2: #{_bert_crf_decode_impl.2} parent=0 // pred_check
    _
  $region3: #{_bert_crf_decode_impl.2} parent=0 // pred_check_branch
    %9 = sbr.rel (0) target = $region5
  $region4: #{_bert_crf_decode_impl.2} parent=0 // pred_region
    _
  $region5: #{_bert_crf_decode_impl.2} parent=0 // pred_fallthru
    _
  // Predicated region
  $region6: #{_bert_crf_decode_impl.2} parent=0 // pred_check
    _
  $region7: #{_bert_crf_decode_impl.2} parent=0 // pred_check_branch
    %11 = sbr.rel (0) target = $region9
  $region8: #{_bert_crf_decode_impl.2} parent=0 // pred_region
    _
  $region9: #{_bert_crf_decode_impl.2} parent=0 // pred_fallthru
    _
  // Predicated region
  $region10: #{_bert_crf_decode_impl.2} parent=0 // pred_check
    _
  $region11: #{_bert_crf_decode_impl.2} parent=0 // pred_check_branch
    %13 = sbr.rel (0) target = $region13
  $region12: #{_bert_crf_decode_impl.2} parent=0 // pred_region
    _
  $region13: #{_bert_crf_decode_impl.2} parent=0 // pred_fallthru
    _
  %v15 = vld [vmem:[%s1] sm:$0xf]
  %v16 = vld [vmem:[%s2] sm:$0xff]
  %18 = vset.pattern.permute.xlu0 0
  %19 = vperm.xlu0 %18, %v16
  %v20 = vpop.permute.xlu0 %19
  %v22 = vld [vmem:[%s0] sm:$0xf]
  %v23 = vld [vmem:[%s0 + $0x4] sm:$0xf]
  %v24 = vld [vmem:[%s0 + $0x8] sm:$0xf]
  %v25 = vld [vmem:[%s0 + $0xc] sm:$0xf]
  %s26 = scalar_lea.vmem %s0, 16
  %v27 = vld [vmem:[%s26] sm:$0xf]
  %v28 = vld [vmem:[%s26 + $0x4] sm:$0xf]
  %v29 = vld [vmem:[%s26 + $0x8] sm:$0xf]
  %v30 = vld [vmem:[%s26 + $0xc] sm:$0xf]
  %v35 = vunpack.c.l.b16 %v22
  %v36 = vunpack.c.l.b16 %v23
  %v37 = vunpack.c.l.b16 %v24
  %v38 = vunpack.c.l.b16 %v25
  %v39 = vpack.c.b16 %v36, %v35
  %v40 = vpack.c.b16 %v38, %v37
  %v47 = vunpack.c.l.b16 %v27
  %v48 = vunpack.c.l.b16 %v28
  %v49 = vunpack.c.l.b16 %v29
  %v50 = vunpack.c.l.b16 %v30
  %v51 = vpack.c.b16 %v48, %v47
  %v52 = vpack.c.b16 %v50, %v49
  %vm55 = vcmask 261120
  %v57 = vsel %vm55, %v15, 0
  %59 = vmatprep.subr.bf16.mxu0 %v51
  %60 = vmatpush1.bf16.msra.mxu0 %v39
  %61 = vmatprep.subr.bf16.mxu0 %v52
  %62 = vmatpush1.bf16.msra.mxu0 %v40
  %63 = vmatprep.subr.bf16.mxu0 0
  %64 = vmatpush1.bf16.msra.mxu0 0
  %65 = vmatprep.subr.bf16.mxu0 0
  %66 = vmatpush1.bf16.msra.mxu0 0
  %67 = vmatprep.subr.bf16.mxu0 0
  %68 = vmatpush1.bf16.msra.mxu0 0
  %69 = vmatprep.subr.bf16.mxu0 0
  %70 = vmatpush1.bf16.msra.mxu0 0
  %71 = vmatprep.subr.bf16.mxu0 0
  %72 = vmatpush1.bf16.msra.mxu0 0
  %73 = vmatprep.subr.bf16.mxu0 0
  %74 = vmatpush1.bf16.msra.mxu0 0
  %75 = vmatprep.subr.bf16.mxu0 0
  %76 = vmatpush1.bf16.msra.mxu0 0
  %77 = vmatprep.subr.bf16.mxu0 0
  %78 = vmatpush1.bf16.msra.mxu0 0
  %79 = vmatprep.subr.bf16.mxu0 0
  %80 = vmatpush1.bf16.msra.mxu0 0
  %81 = vmatprep.subr.bf16.mxu0 0
  %82 = vmatpush1.bf16.msra.mxu0 0
  %83 = vmatprep.subr.bf16.mxu0 0
  %84 = vmatpush1.bf16.msra.mxu0 0
  %85 = vmatprep.subr.bf16.mxu0 0
  %86 = vmatpush1.bf16.msra.mxu0 0
  %87 = vmatprep.subr.bf16.mxu0 0
  %88 = vmatpush1.bf16.msra.mxu0 0
  %89 = vmatprep.subr.bf16.mxu0 0
  %90 = vmatpush1.bf16.msra.mxu0 0
  %91 = vmatprep.mubr.bf16.mxu0 0
  %92 = vmatmul.mubr.bf16.gmra.mrb[0].mxu0 %v57
  %v93 = vpop.f32.mrb[0].mxu0
  %v94 = vadd.f32 %v20, %v93
  %v95 = vpop.f32.mrb[0].mxu0
  %v96 = vadd.f32 %v20, %v95
  %v97 = vpop.f32.mrb[0].mxu0
  %v98 = vpop.f32.mrb[0].mxu0
  %99 = vdwg.mxu0
  %100 = vst [vmem:[%s3] sm:$0xff] %v94
  %s101 = scalar_lea.vmem %s3, 8
  %102 = vst [vmem:[%s101] sm:$0xff] %v96
  %s103 = scalar_lea.vmem %s0, 32
  %v104 = vld [vmem:[%s103] sm:$0xf]
  %v105 = vld [vmem:[%s103 + $0x4] sm:$0xf]
  %v106 = vld [vmem:[%s103 + $0x8] sm:$0xf]
  %v107 = vld [vmem:[%s103 + $0xc] sm:$0xf]
  %s108 = scalar_lea.vmem %s0, 48
  %v109 = vld [vmem:[%s108] sm:$0xf]
  %v110 = vld [vmem:[%s108 + $0x4] sm:$0xf]
  %v111 = vld [vmem:[%s108 + $0x8] sm:$0xf]
  %v112 = vld [vmem:[%s108 + $0xc] sm:$0xf]
  %v117 = vunpack.c.l.b16 %v104
  %v118 = vunpack.c.l.b16 %v105
  %v119 = vunpack.c.l.b16 %v106
  %v120 = vunpack.c.l.b16 %v107
  %v121 = vpack.c.b16 %v118, %v117
  %v122 = vpack.c.b16 %v120, %v119
  %v129 = vunpack.c.l.b16 %v109
  %v130 = vunpack.c.l.b16 %v110
  %v131 = vunpack.c.l.b16 %v111
  %v132 = vunpack.c.l.b16 %v112
  %v133 = vpack.c.b16 %v130, %v129
  %v134 = vpack.c.b16 %v132, %v131
  %137 = vmatprep.subr.bf16.mxu0 %v133
  %138 = vmatpush1.bf16.msra.mxu0 %v121
  %139 = vmatprep.subr.bf16.mxu0 %v134
  %140 = vmatpush1.bf16.msra.mxu0 %v122
  %141 = vmatprep.subr.bf16.mxu0 0
  %142 = vmatpush1.bf16.msra.mxu0 0
  %143 = vmatprep.subr.bf16.mxu0 0
  %144 = vmatpush1.bf16.msra.mxu0 0
  %145 = vmatprep.subr.bf16.mxu0 0
  %146 = vmatpush1.bf16.msra.mxu0 0
  %147 = vmatprep.subr.bf16.mxu0 0
  %148 = vmatpush1.bf16.msra.mxu0 0
  %149 = vmatprep.subr.bf16.mxu0 0
  %150 = vmatpush1.bf16.msra.mxu0 0
  %151 = vmatprep.subr.bf16.mxu0 0
  %152 = vmatpush1.bf16.msra.mxu0 0
  %153 = vmatprep.subr.bf16.mxu0 0
  %154 = vmatpush1.bf16.msra.mxu0 0
  %155 = vmatprep.subr.bf16.mxu0 0
  %156 = vmatpush1.bf16.msra.mxu0 0
  %157 = vmatprep.subr.bf16.mxu0 0
  %158 = vmatpush1.bf16.msra.mxu0 0
  %159 = vmatprep.subr.bf16.mxu0 0
  %160 = vmatpush1.bf16.msra.mxu0 0
  %161 = vmatprep.subr.bf16.mxu0 0
  %162 = vmatpush1.bf16.msra.mxu0 0
  %163 = vmatprep.subr.bf16.mxu0 0
  %164 = vmatpush1.bf16.msra.mxu0 0
  %165 = vmatprep.subr.bf16.mxu0 0
  %166 = vmatpush1.bf16.msra.mxu0 0
  %167 = vmatprep.subr.bf16.mxu0 0
  %168 = vmatpush1.bf16.msra.mxu0 0
  %169 = vmatprep.mubr.bf16.mxu0 0
  %170 = vmatmul.mubr.bf16.gmra.mrb[0].mxu0 %v57
  %v171 = vpop.f32.mrb[0].mxu0
  %v172 = vadd.f32 %v20, %v171
  %v173 = vpop.f32.mrb[0].mxu0
  %v174 = vadd.f32 %v20, %v173
  %v175 = vpop.f32.mrb[0].mxu0
  %v176 = vpop.f32.mrb[0].mxu0
  %177 = vdwg.mxu0
  %s178 = scalar_lea.vmem %s3, 16
  %179 = vst [vmem:[%s178] sm:$0xff] %v172
  %s180 = scalar_lea.vmem %s3, 24
  %181 = vst [vmem:[%s180] sm:$0xff] %v174
  %s182 = scalar_lea.vmem %s0, 64
  %v183 = vld [vmem:[%s182] sm:$0xf]
  %v184 = vld [vmem:[%s182 + $0x4] sm:$0xf]
  %v185 = vld [vmem:[%s182 + $0x8] sm:$0xf]
  %v186 = vld [vmem:[%s182 + $0xc] sm:$0xf]
  %s187 = scalar_lea.vmem %s0, 80
  %v188 = vld [vmem:[%s187] sm:$0xf]
  %v189 = vld [vmem:[%s187 + $0x4] sm:$0xf]
  %v190 = vld [vmem:[%s187 + $0x8] sm:$0xf]
  %v191 = vld [vmem:[%s187 + $0xc] sm:$0xf]
  %v196 = vunpack.c.l.b16 %v183
  %v197 = vunpack.c.l.b16 %v184
  %v198 = vunpack.c.l.b16 %v185
  %v199 = vunpack.c.l.b16 %v186
  %v200 = vpack.c.b16 %v197, %v196
  %v201 = vpack.c.b16 %v199, %v198
  %v208 = vunpack.c.l.b16 %v188
  %v209 = vunpack.c.l.b16 %v189
  %v210 = vunpack.c.l.b16 %v190
  %v211 = vunpack.c.l.b16 %v191
  %v212 = vpack.c.b16 %v209, %v208
  %v213 = vpack.c.b16 %v211, %v210
  %216 = vmatprep.subr.bf16.mxu0 %v212
  %217 = vmatpush1.bf16.msra.mxu0 %v200
  %218 = vmatprep.subr.bf16.mxu0 %v213
  %219 = vmatpush1.bf16.msra.mxu0 %v201
  %220 = vmatprep.subr.bf16.mxu0 0
  %221 = vmatpush1.bf16.msra.mxu0 0
  %222 = vmatprep.subr.bf16.mxu0 0
  %223 = vmatpush1.bf16.msra.mxu0 0
  %224 = vmatprep.subr.bf16.mxu0 0
  %225 = vmatpush1.bf16.msra.mxu0 0
  %226 = vmatprep.subr.bf16.mxu0 0
  %227 = vmatpush1.bf16.msra.mxu0 0
  %228 = vmatprep.subr.bf16.mxu0 0
  %229 = vmatpush1.bf16.msra.mxu0 0
  %230 = vmatprep.subr.bf16.mxu0 0
  %231 = vmatpush1.bf16.msra.mxu0 0
  %232 = vmatprep.subr.bf16.mxu0 0
  %233 = vmatpush1.bf16.msra.mxu0 0
  %234 = vmatprep.subr.bf16.mxu0 0
  %235 = vmatpush1.bf16.msra.mxu0 0
  %236 = vmatprep.subr.bf16.mxu0 0
  %237 = vmatpush1.bf16.msra.mxu0 0
  %238 = vmatprep.subr.bf16.mxu0 0
  %239 = vmatpush1.bf16.msra.mxu0 0
  %240 = vmatprep.subr.bf16.mxu0 0
  %241 = vmatpush1.bf16.msra.mxu0 0
  %242 = vmatprep.subr.bf16.mxu0 0
  %243 = vmatpush1.bf16.msra.mxu0 0
  %244 = vmatprep.subr.bf16.mxu0 0
  %245 = vmatpush1.bf16.msra.mxu0 0
  %246 = vmatprep.subr.bf16.mxu0 0
  %247 = vmatpush1.bf16.msra.mxu0 0
  %248 = vmatprep.mubr.bf16.mxu0 0
  %249 = vmatmul.mubr.bf16.gmra.mrb[0].mxu0 %v57
  %v250 = vpop.f32.mrb[0].mxu0
  %v251 = vadd.f32 %v20, %v250
  %v252 = vpop.f32.mrb[0].mxu0
  %v253 = vadd.f32 %v20, %v252
  %v254 = vpop.f32.mrb[0].mxu0
  %v255 = vpop.f32.mrb[0].mxu0
  %256 = vdwg.mxu0
  %s257 = scalar_lea.vmem %s3, 32
  %258 = vst [vmem:[%s257] sm:$0xff] %v251
  %s259 = scalar_lea.vmem %s3, 40
  %260 = vst [vmem:[%s259] sm:$0xff] %v253
  %s261 = scalar_lea.vmem %s0, 96
  %v262 = vld [vmem:[%s261] sm:$0xf]
  %v263 = vld [vmem:[%s261 + $0x4] sm:$0xf]
  %v264 = vld [vmem:[%s261 + $0x8] sm:$0xf]
  %v265 = vld [vmem:[%s261 + $0xc] sm:$0xf]
  %s266 = scalar_lea.vmem %s0, 112
  %v267 = vld [vmem:[%s266] sm:$0xf]
  %v268 = vld [vmem:[%s266 + $0x4] sm:$0xf]
  %v269 = vld [vmem:[%s266 + $0x8] sm:$0xf]
  %v270 = vld [vmem:[%s266 + $0xc] sm:$0xf]
  %v275 = vunpack.c.l.b16 %v262
  %v276 = vunpack.c.l.b16 %v263
  %v277 = vunpack.c.l.b16 %v264
  %v278 = vunpack.c.l.b16 %v265
  %v279 = vpack.c.b16 %v276, %v275
  %v280 = vpack.c.b16 %v278, %v277
  %v287 = vunpack.c.l.b16 %v267
  %v288 = vunpack.c.l.b16 %v268
  %v289 = vunpack.c.l.b16 %v269
  %v290 = vunpack.c.l.b16 %v270
  %v291 = vpack.c.b16 %v288, %v287
  %v292 = vpack.c.b16 %v290, %v289
  %295 = vmatprep.subr.bf16.mxu0 %v291
  %296 = vmatpush1.bf16.msra.mxu0 %v279
  %297 = vmatprep.subr.bf16.mxu0 %v292
  %298 = vmatpush1.bf16.msra.mxu0 %v280
  %299 = vmatprep.subr.bf16.mxu0 0
  %300 = vmatpush1.bf16.msra.mxu0 0
  %301 = vmatprep.subr.bf16.mxu0 0
  %302 = vmatpush1.bf16.msra.mxu0 0
  %303 = vmatprep.subr.bf16.mxu0 0
  %304 = vmatpush1.bf16.msra.mxu0 0
  %305 = vmatprep.subr.bf16.mxu0 0
  %306 = vmatpush1.bf16.msra.mxu0 0
  %307 = vmatprep.subr.bf16.mxu0 0
  %308 = vmatpush1.bf16.msra.mxu0 0
  %309 = vmatprep.subr.bf16.mxu0 0
  %310 = vmatpush1.bf16.msra.mxu0 0
  %311 = vmatprep.subr.bf16.mxu0 0
  %312 = vmatpush1.bf16.msra.mxu0 0
  %313 = vmatprep.subr.bf16.mxu0 0
  %314 = vmatpush1.bf16.msra.mxu0 0
  %315 = vmatprep.subr.bf16.mxu0 0
  %316 = vmatpush1.bf16.msra.mxu0 0
  %317 = vmatprep.subr.bf16.mxu0 0
  %318 = vmatpush1.bf16.msra.mxu0 0
  %319 = vmatprep.subr.bf16.mxu0 0
  %320 = vmatpush1.bf16.msra.mxu0 0
  %321 = vmatprep.subr.bf16.mxu0 0
  %322 = vmatpush1.bf16.msra.mxu0 0
  %323 = vmatprep.subr.bf16.mxu0 0
  %324 = vmatpush1.bf16.msra.mxu0 0
  %325 = vmatprep.subr.bf16.mxu0 0
  %326 = vmatpush1.bf16.msra.mxu0 0
  %327 = vmatprep.mubr.bf16.mxu0 0
  %328 = vmatmul.mubr.bf16.gmra.mrb[0].mxu0 %v57
  %v329 = vpop.f32.mrb[0].mxu0
  %v330 = vadd.f32 %v20, %v329
  %v331 = vpop.f32.mrb[0].mxu0
  %v332 = vadd.f32 %v20, %v331
  %v333 = vpop.f32.mrb[0].mxu0
  %v334 = vpop.f32.mrb[0].mxu0
  %335 = vdwg.mxu0
  %s336 = scalar_lea.vmem %s3, 48
  %337 = vst [vmem:[%s336] sm:$0xff] %v330
  %s338 = scalar_lea.vmem %s3, 56
  %339 = vst [vmem:[%s338] sm:$0xff] %v332
  // Predicated region
  $region14: #{_bert_crf_decode_impl.2} parent=0 // pred_check
    _
  $region15: #{_bert_crf_decode_impl.2} parent=0 // pred_check_branch
    %341 = sbr.rel (0) target = $region17
  $region16: #{_bert_crf_decode_impl.2} parent=0 // pred_region
    _
  $region17: #{_bert_crf_decode_impl.2} parent=0 // pred_fallthru
    _
  // Predicated region
  $region18: #{_bert_crf_decode_impl.2} parent=0 // pred_check
    _
  $region19: #{_bert_crf_decode_impl.2} parent=0 // pred_check_branch
    %343 = sbr.rel (0) target = $region21
  $region20: #{_bert_crf_decode_impl.2} parent=0 // pred_region
    _
  $region21: #{_bert_crf_decode_impl.2} parent=0 // pred_fallthru
    _

</llo_original>
